<compile_context>
chip_gen: v5e
topology: v5e:2x2
jax: 0.10.0
libtpu: 0.0.40
codegen_flags: <defaults>
</compile_context>

<pallas_src>
import functools

import jax
import jax.numpy as jnp
from jax.experimental import pallas as pl
from jax.experimental.pallas import tpu as pltpu


def _focal_kernel(labels_ref, alpha_ref, logits_ref, loss_ref, *,
                  num_classes, gamma, smoothing, eps):
    x = logits_ref[...].astype(jnp.float32)                      # (TN, C)
    tn = x.shape[0]

    # Numerically-stable softmax pieces. The full-tile exp is required for the
    # denominator; everything after this point is per-row (TN, 1) only.
    m = jnp.max(x, axis=-1, keepdims=True)                       # (TN, 1) XLU
    e = jnp.exp(x - m)                                           # (TN, C) EUP
    s = jnp.sum(e, axis=-1, keepdims=True)                       # (TN, 1) XLU

    # EUP approx reciprocal + one Newton step -> ~f32 accuracy, no divide.
    inv_s = pl.reciprocal(s, approx=True)
    inv_s = inv_s * (2.0 - s * inv_s)

    # One-hot gather of the true-class exp and per-class alpha (VPU mul + XLU
    # lane reduce). Out-of-range labels (used for row padding) never match,
    # so a_t == 0 and the row contributes exactly zero loss.
    labels = labels_ref[...]                                     # (TN, 1) int32
    cls_idx = jax.lax.broadcasted_iota(jnp.int32, (tn, num_classes), 1)
    hot = (cls_idx == labels).astype(jnp.float32)                # (TN, C)
    e_t = jnp.sum(hot * e, axis=-1, keepdims=True)               # (TN, 1)
    a_t = jnp.sum(hot * alpha_ref[...], axis=-1, keepdims=True)  # (TN, 1)

    # Label-smoothed true-class probability, clipped like the torch module.
    p_t = (1.0 - smoothing) * (e_t * inv_s) + (smoothing / num_classes)
    p_t = jnp.clip(p_t, eps, 1.0 - eps)

    one_minus = 1.0 - p_t
    gi = int(gamma)
    if float(gi) == float(gamma) and 0 <= gi <= 8:
        # gamma == 2 (default): two VPU multiplies, no pow/exp/log on EUP.
        focal = jnp.ones_like(one_minus)
        for _ in range(gi):
            focal = focal * one_minus
    else:
        focal = jnp.power(one_minus, jnp.float32(gamma))

    # Per-row focal loss: -alpha_t * (1 - p_t)^gamma * log(p_t).
    loss_ref[...] = -(a_t * focal) * jnp.log(p_t)                # (TN, 1)


def focal_loss(logits, labels, alpha=None, *, gamma=2.0, smoothing=0.1,
               reduction="mean", row_tile=None):
    """logits: (N, C) float; labels: (N,) int.

    Returns a scalar float32 loss for reduction in {"mean", "sum"}, or the
    per-row losses (N,) for reduction == "none".
    """
    if reduction not in ("mean", "sum", "none"):
        raise ValueError(f"Invalid reduction value, but got {reduction}.")
    if gamma < 0:
        raise ValueError(f"Invalid gamma value, but got {gamma}.")
    n, c = logits.shape
    if c <= 1:
        raise ValueError(f"Invalid num_classes value, but got {c}")
    if alpha is None:
        alpha = jnp.ones((c,), dtype=jnp.float32)
    alpha = jnp.asarray(alpha, dtype=jnp.float32).reshape(1, c)

    # Row tile: as large as possible (amortizes per-step pipeline overhead)
    # while the double-buffered (row_tile, C) f32 logits tile stays under
    # ~16 MiB, which fits the 32 MiB scoped-VMEM limit on v5e/v6e/v7x alike.
    if row_tile is None:
        budget_rows = (16 * 1024 * 1024) // (2 * 4 * max(c, 1))
        row_tile = min(1024, budget_rows, ((n + 7) // 8) * 8)
    row_tile = max(8, (row_tile // 8) * 8)

    # Pad rows to a tile multiple; padded rows get label -1 -> zero loss.
    n_pad = ((n + row_tile - 1) // row_tile) * row_tile
    labels = labels.astype(jnp.int32)
    if n_pad != n:
        logits = jnp.pad(logits, ((0, n_pad - n), (0, 0)))
        labels = jnp.pad(labels, ((0, n_pad - n),), constant_values=-1)
    labels_col = labels.reshape(n_pad, 1)

    kernel = functools.partial(
        _focal_kernel, num_classes=c, gamma=float(gamma),
        smoothing=float(smoothing), eps=1e-10)

    per_row = pl.pallas_call(
        kernel,
        out_shape=jax.ShapeDtypeStruct((n_pad, 1), jnp.float32),
        grid_spec=pltpu.PrefetchScalarGridSpec(
            num_scalar_prefetch=0,
            grid=(n_pad // row_tile,),
            in_specs=[
                pl.BlockSpec((row_tile, 1), lambda i: (i, 0)),   # labels
                pl.BlockSpec((1, c), lambda i: (0, 0)),          # alpha
                pl.BlockSpec((row_tile, c), lambda i: (i, 0)),   # logits
            ],
            out_specs=pl.BlockSpec((row_tile, 1), lambda i: (i, 0)),
        ),
        compiler_params=pltpu.CompilerParams(
            dimension_semantics=("parallel",),
            vmem_limit_bytes=32 * 1024 * 1024),
    )(labels_col, alpha, logits)

    per_row = per_row[:n, 0]
    if reduction == "mean":
        return jnp.mean(per_row)
    if reduction == "sum":
        return jnp.sum(per_row)
    return per_row


def _focal_loss_ref(logits, labels, alpha, gamma, smoothing, reduction):
    c = logits.shape[-1]
    hot = jax.nn.one_hot(labels, c, dtype=jnp.float32)
    preds = (1.0 - smoothing) * jax.nn.softmax(logits.astype(jnp.float32), -1) \
        + smoothing / c
    preds = jnp.clip(preds, 1e-10, 1.0 - 1e-10)
    ce = -hot * jnp.log(preds)
    w = jnp.asarray(alpha, jnp.float32).reshape(1, c) * hot * (1.0 - preds) ** gamma
    per_row = jnp.sum(w * ce, axis=-1)
    if reduction == "mean":
        return jnp.mean(per_row)
    if reduction == "sum":
        return jnp.sum(per_row)
    return per_row


if __name__ == "__main__":
    key = jax.random.PRNGKey(0)
    k_logits, k_labels, k_logits2, k_labels2 = jax.random.split(key, 4)

    # Case 1: small, tile-friendly shapes, mean reduction (matches the module).
    N, C = 64, 8
    logits = jax.random.normal(k_logits, (N, C), dtype=jnp.float32)
    labels = jax.random.randint(k_labels, (N,), 0, C, dtype=jnp.int32)
    alpha = jnp.ones((C,), dtype=jnp.float32)

    loss = focal_loss(logits, labels, alpha, gamma=2.0, smoothing=0.1,
                      reduction="mean")
    loss = jax.block_until_ready(loss)
    ref = _focal_loss_ref(logits, labels, alpha, 2.0, 0.1, "mean")
    assert jnp.allclose(loss, ref, rtol=1e-5, atol=1e-6), (loss, ref)

    # Case 2: row count not a multiple of the tile (exercises padding) + sum.
    N2, C2 = 50, 16
    logits2 = jax.random.normal(k_logits2, (N2, C2), dtype=jnp.float32)
    labels2 = jax.random.randint(k_labels2, (N2,), 0, C2, dtype=jnp.int32)
    loss2 = focal_loss(logits2, labels2, None, gamma=2.0, smoothing=0.1,
                       reduction="sum")
    loss2 = jax.block_until_ready(loss2)
    ref2 = _focal_loss_ref(logits2, labels2, jnp.ones((C2,), jnp.float32),
                           2.0, 0.1, "sum")
    assert jnp.allclose(loss2, ref2, rtol=1e-5, atol=1e-5), (loss2, ref2)

    print("KERNEL_OK")
</pallas_src>

<mosaic_0001>
module attributes {stable_mosaic.version = 11 : i64} {
  func.func @_focal_kernel(%arg0: i32, %arg1: memref<64x1xi32, #tpu.memory_space<vmem>>, %arg2: memref<1x8xf32, #tpu.memory_space<vmem>>, %arg3: memref<64x8xf32, #tpu.memory_space<vmem>>, %arg4: memref<64x1xf32, #tpu.memory_space<vmem>>) attributes {dimension_semantics = [#tpu.dimension_semantics<parallel>], iteration_bounds = array<i64: 1>, scalar_prefetch = 0 : i64, scratch_operands = 0 : i64, tpu.core_type = #tpu.core_type<tc>, window_params = [{transform_indices = @transform_0, window_bounds = array<i64: 64, 1>}, {pipeline_mode = #tpu.pipeline_mode<synchronous>, transform_indices = @transform_1, window_bounds = array<i64: 1, 8>}, {transform_indices = @transform_2, window_bounds = array<i64: 64, 8>}, {transform_indices = @transform_3, window_bounds = array<i64: 64, 1>}]} {
    %c0 = arith.constant 0 : index
    %c0_0 = arith.constant 0 : index
    %0 = vector.load %arg3[%c0, %c0_0] : memref<64x8xf32, #tpu.memory_space<vmem>>, vector<64x8xf32>
    %cst = arith.constant dense<0xFF800000> : vector<64xf32>
    %1 = vector.multi_reduction <maximumf>, %0, %cst [1] : vector<64x8xf32> to vector<64xf32>
    %2 = vector.shape_cast %1 : vector<64xf32> to vector<64x1xf32>
    %3 = vector.broadcast %2 : vector<64x1xf32> to vector<64x8xf32>
    %4 = arith.subf %0, %3 : vector<64x8xf32>
    %5 = math.exp %4 : vector<64x8xf32>
    %cst_1 = arith.constant dense<0.000000e+00> : vector<64xf32>
    %6 = vector.multi_reduction <add>, %5, %cst_1 [1] : vector<64x8xf32> to vector<64xf32>
    %7 = vector.shape_cast %6 : vector<64xf32> to vector<64x1xf32>
    %8 = tpu.reciprocal %7 {approx = true} : vector<64x1xf32> -> vector<64x1xf32>
    %9 = arith.mulf %7, %8 : vector<64x1xf32>
    %cst_2 = arith.constant 2.000000e+00 : f32
    %10 = vector.broadcast %cst_2 : f32 to vector<64x1xf32>
    %11 = arith.subf %10, %9 : vector<64x1xf32>
    %12 = arith.mulf %8, %11 : vector<64x1xf32>
    %c0_3 = arith.constant 0 : index
    %c0_4 = arith.constant 0 : index
    %13 = vector.load %arg1[%c0_3, %c0_4] : memref<64x1xi32, #tpu.memory_space<vmem>>, vector<64x1xi32>
    %14 = tpu.iota {dimensions = array<i32: 1>} : vector<64x8xi32>
    %15 = vector.broadcast %13 : vector<64x1xi32> to vector<64x8xi32>
    %16 = arith.cmpi eq, %14, %15 : vector<64x8xi32>
    %17 = arith.extui %16 : vector<64x8xi1> to vector<64x8xi32>
    %18 = arith.sitofp %17 : vector<64x8xi32> to vector<64x8xf32>
    %19 = arith.mulf %18, %5 : vector<64x8xf32>
    %cst_5 = arith.constant dense<0.000000e+00> : vector<64xf32>
    %20 = vector.multi_reduction <add>, %19, %cst_5 [1] : vector<64x8xf32> to vector<64xf32>
    %21 = vector.shape_cast %20 : vector<64xf32> to vector<64x1xf32>
    %c0_6 = arith.constant 0 : index
    %c0_7 = arith.constant 0 : index
    %22 = vector.load %arg2[%c0_6, %c0_7] : memref<1x8xf32, #tpu.memory_space<vmem>>, vector<1x8xf32>
    %23 = vector.broadcast %22 : vector<1x8xf32> to vector<64x8xf32>
    %24 = arith.mulf %18, %23 : vector<64x8xf32>
    %cst_8 = arith.constant dense<0.000000e+00> : vector<64xf32>
    %25 = vector.multi_reduction <add>, %24, %cst_8 [1] : vector<64x8xf32> to vector<64xf32>
    %26 = vector.shape_cast %25 : vector<64xf32> to vector<64x1xf32>
    %27 = arith.mulf %21, %12 : vector<64x1xf32>
    %cst_9 = arith.constant 0.899999976 : f32
    %28 = vector.broadcast %cst_9 : f32 to vector<64x1xf32>
    %29 = arith.mulf %28, %27 : vector<64x1xf32>
    %cst_10 = arith.constant 1.250000e-02 : f32
    %30 = vector.broadcast %cst_10 : f32 to vector<64x1xf32>
    %31 = arith.addf %29, %30 : vector<64x1xf32>
    %cst_11 = arith.constant 1.000000e-10 : f32
    %cst_12 = arith.constant 1.000000e+00 : f32
    %32 = vector.broadcast %cst_11 : f32 to vector<64x1xf32>
    %33 = arith.maximumf %32, %31 : vector<64x1xf32>
    %34 = vector.broadcast %cst_12 : f32 to vector<64x1xf32>
    %35 = arith.minimumf %34, %33 : vector<64x1xf32>
    %cst_13 = arith.constant 1.000000e+00 : f32
    %36 = vector.broadcast %cst_13 : f32 to vector<64x1xf32>
    %37 = arith.subf %36, %35 : vector<64x1xf32>
    %cst_14 = arith.constant 1.000000e+00 : f32
    %38 = vector.broadcast %cst_14 : f32 to vector<64x1xf32>
    %39 = arith.mulf %38, %37 : vector<64x1xf32>
    %40 = arith.mulf %39, %37 : vector<64x1xf32>
    %41 = arith.mulf %26, %40 : vector<64x1xf32>
    %cst_15 = arith.constant 0.000000e+00 : f32
    %42 = vector.broadcast %cst_15 : f32 to vector<64x1xf32>
    %43 = arith.subf %42, %41 : vector<64x1xf32>
    %44 = math.log %35 : vector<64x1xf32>
    %45 = arith.mulf %43, %44 : vector<64x1xf32>
    %c0_16 = arith.constant 0 : index
    %c0_17 = arith.constant 0 : index
    %46 = vector.load %arg4[%c0_16, %c0_17] : memref<64x1xf32, #tpu.memory_space<vmem>>, vector<64x1xf32>
    tpu.vector_store %arg4[%c0_16, %c0_17], %45 {strides = array<i32>} : memref<64x1xf32, #tpu.memory_space<vmem>>, vector<64x1xf32>,
    return
  }
  func.func @transform_0(%arg0: i32) -> (i32, i32) {
    %c0_i32 = arith.constant 0 : i32
    %c0_i32_0 = arith.constant 0 : i32
    return %arg0, %c0_i32 : i32, i32
  }
  func.func @transform_1(%arg0: i32) -> (i32, i32) {
    %c0_i32 = arith.constant 0 : i32
    %c0_i32_0 = arith.constant 0 : i32
    %c0_i32_1 = arith.constant 0 : i32
    return %c0_i32, %c0_i32_0 : i32, i32
  }
  func.func @transform_2(%arg0: i32) -> (i32, i32) {
    %c0_i32 = arith.constant 0 : i32
    %c0_i32_0 = arith.constant 0 : i32
    return %arg0, %c0_i32 : i32, i32
  }
  func.func @transform_3(%arg0: i32) -> (i32, i32) {
    %c0_i32 = arith.constant 0 : i32
    %c0_i32_0 = arith.constant 0 : i32
    return %arg0, %c0_i32 : i32, i32
  }
}

</mosaic_0001>

<llo_original>
// kernel: tpu_custom_call.1
$region0: #{tpu_custom_call.1}
  #allocation0 [shape = 'u32[]', space=smem, size = 0x4, offset = 0x4, fixed_abs, tag = 'smem constant byte address 0x4 - core index']
  #allocation1 [shape = 'u32[72,128]{1,0:T(1,128)}', space=vmem, size = 0x9000, scoped, tag = 'internal scratch']
  %s0 = inlined_call_operand.vmem [shape: s32[64,1], index: 0, kind: input, shape index: {}]
  %s1 = inlined_call_operand.vmem [shape: f32[1,8], index: 1, kind: input, shape index: {}]
  %s2 = inlined_call_operand.vmem [shape: f32[64,8], index: 2, kind: input, shape index: {}]
  %s3 = inlined_call_operand.vmem [shape: f32[64,1], index: 3, kind: output, shape index: {}]
  %s4 = sld [smem:[#allocation0]]
  $region22: #{tpu_custom_call.1} parent=0
    _
  %s6 = ssub.s32 1, %s4
  %s7 = scalar_select 0, %s6, %s4
  // Predicated region
  $region2: #{tpu_custom_call.1} parent=0 // pred_check
    _
  $region3: #{tpu_custom_call.1} parent=0 // pred_check_branch
    %9 = sbr.rel (0) target = $region5
  $region4: #{tpu_custom_call.1} parent=0 // pred_region
    _
  $region5: #{tpu_custom_call.1} parent=0 // pred_fallthru
    _
  // Predicated region
  $region6: #{tpu_custom_call.1} parent=0 // pred_check
    _
  $region7: #{tpu_custom_call.1} parent=0 // pred_check_branch
    %11 = sbr.rel (0) target = $region9
  $region8: #{tpu_custom_call.1} parent=0 // pred_region
    _
  $region9: #{tpu_custom_call.1} parent=0 // pred_fallthru
    _
  // Predicated region
  $region10: #{tpu_custom_call.1} parent=0 // pred_check
    _
  $region11: #{tpu_custom_call.1} parent=0 // pred_check_branch
    %13 = sbr.rel (0) target = $region13
  $region12: #{tpu_custom_call.1} parent=0 // pred_region
    _
  $region13: #{tpu_custom_call.1} parent=0 // pred_fallthru
    _
  %v14 = vld [vmem:[%s2] sm:$0xff]
  %v15 = vld [vmem:[%s2 + $0x8] sm:$0xff]
  %v16 = vld [vmem:[%s2 + $0x10] sm:$0xff]
  %v17 = vld [vmem:[%s2 + $0x18] sm:$0xff]
  %v18 = vld [vmem:[%s2 + $0x20] sm:$0xff]
  %v19 = vld [vmem:[%s2 + $0x28] sm:$0xff]
  %v20 = vld [vmem:[%s2 + $0x30] sm:$0xff]
  %v21 = vld [vmem:[%s2 + $0x38] sm:$0xff]
  %vm22 = vcmask 64512
  %v23 = vsel %vm22, %v14, -inf
  %24 = vmax.xlane.f32.xlu0 %v23
  %v25 = vpop.xlane.xlu0 %24
  %v26 = vsel %vm22, %v15, -inf
  %27 = vmax.xlane.f32.xlu0 %v26
  %v28 = vpop.xlane.xlu0 %27
  %v29 = vsel %vm22, %v16, -inf
  %30 = vmax.xlane.f32.xlu0 %v29
  %v31 = vpop.xlane.xlu0 %30
  %v32 = vsel %vm22, %v17, -inf
  %33 = vmax.xlane.f32.xlu0 %v32
  %v34 = vpop.xlane.xlu0 %33
  %v35 = vsel %vm22, %v18, -inf
  %36 = vmax.xlane.f32.xlu0 %v35
  %v37 = vpop.xlane.xlu0 %36
  %v38 = vsel %vm22, %v19, -inf
  %39 = vmax.xlane.f32.xlu0 %v38
  %v40 = vpop.xlane.xlu0 %39
  %v41 = vsel %vm22, %v20, -inf
  %42 = vmax.xlane.f32.xlu0 %v41
  %v43 = vpop.xlane.xlu0 %42
  %v44 = vsel %vm22, %v21, -inf
  %45 = vmax.xlane.f32.xlu0 %v44
  %v46 = vpop.xlane.xlu0 %45
  %v47 = vsub.f32 %v14, %v25
  %v48 = vsub.f32 %v15, %v28
  %v49 = vsub.f32 %v16, %v31
  %v50 = vsub.f32 %v17, %v34
  %v51 = vsub.f32 %v18, %v37
  %v52 = vsub.f32 %v19, %v40
  %v53 = vsub.f32 %v20, %v43
  %v54 = vsub.f32 %v21, %v46
  %v55 = vmul.f32 %v47, 1.442695
  %v56 = vpow.pop %v55
  %v57 = vmul.f32 %v48, 1.442695
  %v58 = vpow.pop %v57
  %v59 = vmul.f32 %v49, 1.442695
  %v60 = vpow.pop %v59
  %v61 = vmul.f32 %v50, 1.442695
  %v62 = vpow.pop %v61
  %v63 = vmul.f32 %v51, 1.442695
  %v64 = vpow.pop %v63
  %v65 = vmul.f32 %v52, 1.442695
  %v66 = vpow.pop %v65
  %v67 = vmul.f32 %v53, 1.442695
  %v68 = vpow.pop %v67
  %v69 = vmul.f32 %v54, 1.442695
  %v70 = vpow.pop %v69
  %v71 = vsel %vm22, %v56, 0.0
  %72 = vadd.xlane.f32.xlu0 %v71
  %v73 = vpop.xlane.xlu0 %72
  %v74 = vsel %vm22, %v58, 0.0
  %75 = vadd.xlane.f32.xlu0 %v74
  %v76 = vpop.xlane.xlu0 %75
  %v77 = vsel %vm22, %v60, 0.0
  %78 = vadd.xlane.f32.xlu0 %v77
  %v79 = vpop.xlane.xlu0 %78
  %v80 = vsel %vm22, %v62, 0.0
  %81 = vadd.xlane.f32.xlu0 %v80
  %v82 = vpop.xlane.xlu0 %81
  %v83 = vsel %vm22, %v64, 0.0
  %84 = vadd.xlane.f32.xlu0 %v83
  %v85 = vpop.xlane.xlu0 %84
  %v86 = vsel %vm22, %v66, 0.0
  %87 = vadd.xlane.f32.xlu0 %v86
  %v88 = vpop.xlane.xlu0 %87
  %v89 = vsel %vm22, %v68, 0.0
  %90 = vadd.xlane.f32.xlu0 %v89
  %v91 = vpop.xlane.xlu0 %90
  %v92 = vsel %vm22, %v70, 0.0
  %93 = vadd.xlane.f32.xlu0 %v92
  %v94 = vpop.xlane.xlu0 %93
  %v95 = vrcp.pop %v73
  %v96 = vrcp.pop %v76
  %v97 = vrcp.pop %v79
  %v98 = vrcp.pop %v82
  %v99 = vrcp.pop %v85
  %v100 = vrcp.pop %v88
  %v101 = vrcp.pop %v91
  %v102 = vrcp.pop %v94
  %v103 = vmul.f32 %v73, %v95
  %v104 = vmul.f32 %v76, %v96
  %v105 = vmul.f32 %v79, %v97
  %v106 = vmul.f32 %v82, %v98
  %v107 = vmul.f32 %v85, %v99
  %v108 = vmul.f32 %v88, %v100
  %v109 = vmul.f32 %v91, %v101
  %v110 = vmul.f32 %v94, %v102
  %v111 = vsub.f32 2.0, %v103
  %v112 = vsub.f32 2.0, %v104
  %v113 = vsub.f32 2.0, %v105
  %v114 = vsub.f32 2.0, %v106
  %v115 = vsub.f32 2.0, %v107
  %v116 = vsub.f32 2.0, %v108
  %v117 = vsub.f32 2.0, %v109
  %v118 = vsub.f32 2.0, %v110
  %v119 = vmul.f32 %v95, %v111
  %v120 = vmul.f32 %v96, %v112
  %v121 = vmul.f32 %v97, %v113
  %v122 = vmul.f32 %v98, %v114
  %v123 = vmul.f32 %v99, %v115
  %v124 = vmul.f32 %v100, %v116
  %v125 = vmul.f32 %v101, %v117
  %v126 = vmul.f32 %v102, %v118
  %v127 = vld [vmem:[%s0] sm:$0xff]
  %v128 = vld [vmem:[%s0 + $0x8] sm:$0xff]
  %v129 = vld [vmem:[%s0 + $0x10] sm:$0xff]
  %v130 = vld [vmem:[%s0 + $0x18] sm:$0xff]
  %v131 = vld [vmem:[%s0 + $0x20] sm:$0xff]
  %v132 = vld [vmem:[%s0 + $0x28] sm:$0xff]
  %v133 = vld [vmem:[%s0 + $0x30] sm:$0xff]
  %v134 = vld [vmem:[%s0 + $0x38] sm:$0xff]
  %v135 = vlaneseq
  %v136 = vand.u32 %v135, 127
  %137 = vset.pattern.permute.xlu0 0
  %138 = vperm.xlu0 %137, %v127
  %v139 = vpop.permute.xlu0 %138
  %140 = vset.pattern.permute.xlu0 0
  %141 = vperm.xlu0 %140, %v128
  %v142 = vpop.permute.xlu0 %141
  %143 = vset.pattern.permute.xlu0 0
  %144 = vperm.xlu0 %143, %v129
  %v145 = vpop.permute.xlu0 %144
  %146 = vset.pattern.permute.xlu0 0
  %147 = vperm.xlu0 %146, %v130
  %v148 = vpop.permute.xlu0 %147
  %149 = vset.pattern.permute.xlu0 0
  %150 = vperm.xlu0 %149, %v131
  %v151 = vpop.permute.xlu0 %150
  %152 = vset.pattern.permute.xlu0 0
  %153 = vperm.xlu0 %152, %v132
  %v154 = vpop.permute.xlu0 %153
  %155 = vset.pattern.permute.xlu0 0
  %156 = vperm.xlu0 %155, %v133
  %v157 = vpop.permute.xlu0 %156
  %158 = vset.pattern.permute.xlu0 0
  %159 = vperm.xlu0 %158, %v134
  %v160 = vpop.permute.xlu0 %159
  %vm161 = vcmp.eq.s32.totalorder %v136, %v139
  %vm162 = vcmp.eq.s32.totalorder %v136, %v142
  %vm163 = vcmp.eq.s32.totalorder %v136, %v145
  %vm164 = vcmp.eq.s32.totalorder %v136, %v148
  %vm165 = vcmp.eq.s32.totalorder %v136, %v151
  %vm166 = vcmp.eq.s32.totalorder %v136, %v154
  %vm167 = vcmp.eq.s32.totalorder %v136, %v157
  %vm168 = vcmp.eq.s32.totalorder %v136, %v160
  %v169 = vsel %vm161, 1, 0
  %v170 = vsel %vm162, 1, 0
  %v171 = vsel %vm163, 1, 0
  %v172 = vsel %vm164, 1, 0
  %v173 = vsel %vm165, 1, 0
  %v174 = vsel %vm166, 1, 0
  %v175 = vsel %vm167, 1, 0
  %v176 = vsel %vm168, 1, 0
  %v177 = vcvt.s32.f32 %v169
  %v178 = vcvt.s32.f32 %v170
  %v179 = vcvt.s32.f32 %v171
  %v180 = vcvt.s32.f32 %v172
  %v181 = vcvt.s32.f32 %v173
  %v182 = vcvt.s32.f32 %v174
  %v183 = vcvt.s32.f32 %v175
  %v184 = vcvt.s32.f32 %v176
  %v185 = vmul.f32 %v177, %v56
  %v186 = vmul.f32 %v178, %v58
  %v187 = vmul.f32 %v179, %v60
  %v188 = vmul.f32 %v180, %v62
  %v189 = vmul.f32 %v181, %v64
  %v190 = vmul.f32 %v182, %v66
  %v191 = vmul.f32 %v183, %v68
  %v192 = vmul.f32 %v184, %v70
  %v193 = vsel %vm22, %v185, 0.0
  %194 = vadd.xlane.f32.xlu0 %v193
  %v195 = vpop.xlane.xlu0 %194
  %v196 = vsel %vm22, %v186, 0.0
  %197 = vadd.xlane.f32.xlu0 %v196
  %v198 = vpop.xlane.xlu0 %197
  %v199 = vsel %vm22, %v187, 0.0
  %200 = vadd.xlane.f32.xlu0 %v199
  %v201 = vpop.xlane.xlu0 %200
  %v202 = vsel %vm22, %v188, 0.0
  %203 = vadd.xlane.f32.xlu0 %v202
  %v204 = vpop.xlane.xlu0 %203
  %v205 = vsel %vm22, %v189, 0.0
  %206 = vadd.xlane.f32.xlu0 %v205
  %v207 = vpop.xlane.xlu0 %206
  %v208 = vsel %vm22, %v190, 0.0
  %209 = vadd.xlane.f32.xlu0 %v208
  %v210 = vpop.xlane.xlu0 %209
  %v211 = vsel %vm22, %v191, 0.0
  %212 = vadd.xlane.f32.xlu0 %v211
  %v213 = vpop.xlane.xlu0 %212
  %v214 = vsel %vm22, %v192, 0.0
  %215 = vadd.xlane.f32.xlu0 %v214
  %v216 = vpop.xlane.xlu0 %215
  %v217 = vld [vmem:[%s1] sm:$0x1]
  %v219 = vperm.slane %v217, 0
  %v221 = vmul.f32 %v177, %v219
  %v222 = vmul.f32 %v178, %v219
  %v223 = vmul.f32 %v179, %v219
  %v224 = vmul.f32 %v180, %v219
  %v225 = vmul.f32 %v181, %v219
  %v226 = vmul.f32 %v182, %v219
  %v227 = vmul.f32 %v183, %v219
  %v228 = vmul.f32 %v184, %v219
  %v229 = vsel %vm22, %v221, 0.0
  %230 = vadd.xlane.f32.xlu0 %v229
  %v231 = vpop.xlane.xlu0 %230
  %v232 = vsel %vm22, %v222, 0.0
  %233 = vadd.xlane.f32.xlu0 %v232
  %v234 = vpop.xlane.xlu0 %233
  %v235 = vsel %vm22, %v223, 0.0
  %236 = vadd.xlane.f32.xlu0 %v235
  %v237 = vpop.xlane.xlu0 %236
  %v238 = vsel %vm22, %v224, 0.0
  %239 = vadd.xlane.f32.xlu0 %v238
  %v240 = vpop.xlane.xlu0 %239
  %v241 = vsel %vm22, %v225, 0.0
  %242 = vadd.xlane.f32.xlu0 %v241
  %v243 = vpop.xlane.xlu0 %242
  %v244 = vsel %vm22, %v226, 0.0
  %245 = vadd.xlane.f32.xlu0 %v244
  %v246 = vpop.xlane.xlu0 %245
  %v247 = vsel %vm22, %v227, 0.0
  %248 = vadd.xlane.f32.xlu0 %v247
  %v249 = vpop.xlane.xlu0 %248
  %v250 = vsel %vm22, %v228, 0.0
  %251 = vadd.xlane.f32.xlu0 %v250
  %v252 = vpop.xlane.xlu0 %251
  %v253 = vmul.f32 %v195, %v119
  %v254 = vmul.f32 %v198, %v120
  %v255 = vmul.f32 %v201, %v121
  %v256 = vmul.f32 %v204, %v122
  %v257 = vmul.f32 %v207, %v123
  %v258 = vmul.f32 %v210, %v124
  %v259 = vmul.f32 %v213, %v125
  %v260 = vmul.f32 %v216, %v126
  %v261 = vmul.f32 %v253, 0.9
  %v262 = vmul.f32 %v254, 0.9
  %v263 = vmul.f32 %v255, 0.9
  %v264 = vmul.f32 %v256, 0.9
  %v265 = vmul.f32 %v257, 0.9
  %v266 = vmul.f32 %v258, 0.9
  %v267 = vmul.f32 %v259, 0.9
  %v268 = vmul.f32 %v260, 0.9
  %v269 = vadd.f32 %v261, 0.0125
  %v270 = vadd.f32 %v262, 0.0125
  %v271 = vadd.f32 %v263, 0.0125
  %v272 = vadd.f32 %v264, 0.0125
  %v273 = vadd.f32 %v265, 0.0125
  %v274 = vadd.f32 %v266, 0.0125
  %v275 = vadd.f32 %v267, 0.0125
  %v276 = vadd.f32 %v268, 0.0125
  %v277 = vmax.f32 %v269, 1e-10
  %v278 = vmax.f32 %v270, 1e-10
  %v279 = vmax.f32 %v271, 1e-10
  %v280 = vmax.f32 %v272, 1e-10
  %v281 = vmax.f32 %v273, 1e-10
  %v282 = vmax.f32 %v274, 1e-10
  %v283 = vmax.f32 %v275, 1e-10
  %v284 = vmax.f32 %v276, 1e-10
  %v285 = vmin.f32 %v277, 1.0
  %v286 = vmin.f32 %v278, 1.0
  %v287 = vmin.f32 %v279, 1.0
  %v288 = vmin.f32 %v280, 1.0
  %v289 = vmin.f32 %v281, 1.0
  %v290 = vmin.f32 %v282, 1.0
  %v291 = vmin.f32 %v283, 1.0
  %v292 = vmin.f32 %v284, 1.0
  %v293 = vsub.f32 1.0, %v285
  %v294 = vsub.f32 1.0, %v286
  %v295 = vsub.f32 1.0, %v287
  %v296 = vsub.f32 1.0, %v288
  %v297 = vsub.f32 1.0, %v289
  %v298 = vsub.f32 1.0, %v290
  %v299 = vsub.f32 1.0, %v291
  %v300 = vsub.f32 1.0, %v292
  %v301 = vmul.f32 %v293, %v293
  %v302 = vmul.f32 %v294, %v294
  %v303 = vmul.f32 %v295, %v295
  %v304 = vmul.f32 %v296, %v296
  %v305 = vmul.f32 %v297, %v297
  %v306 = vmul.f32 %v298, %v298
  %v307 = vmul.f32 %v299, %v299
  %v308 = vmul.f32 %v300, %v300
  %v309 = vmul.f32 %v231, %v301
  %v310 = vmul.f32 %v234, %v302
  %v311 = vmul.f32 %v237, %v303
  %v312 = vmul.f32 %v240, %v304
  %v313 = vmul.f32 %v243, %v305
  %v314 = vmul.f32 %v246, %v306
  %v315 = vmul.f32 %v249, %v307
  %v316 = vmul.f32 %v252, %v308
  %v317 = vsub.f32 0.0, %v309
  %v318 = vsub.f32 0.0, %v310
  %v319 = vsub.f32 0.0, %v311
  %v320 = vsub.f32 0.0, %v312
  %v321 = vsub.f32 0.0, %v313
  %v322 = vsub.f32 0.0, %v314
  %v323 = vsub.f32 0.0, %v315
  %v324 = vsub.f32 0.0, %v316
  %v325 = vlog2.pop %v285
  %v326 = vmul.f32 %v325, 0.6931472
  %v327 = vlog2.pop %v286
  %v328 = vmul.f32 %v327, 0.6931472
  %v329 = vlog2.pop %v287
  %v330 = vmul.f32 %v329, 0.6931472
  %v331 = vlog2.pop %v288
  %v332 = vmul.f32 %v331, 0.6931472
  %v333 = vlog2.pop %v289
  %v334 = vmul.f32 %v333, 0.6931472
  %v335 = vlog2.pop %v290
  %v336 = vmul.f32 %v335, 0.6931472
  %v337 = vlog2.pop %v291
  %v338 = vmul.f32 %v337, 0.6931472
  %v339 = vlog2.pop %v292
  %v340 = vmul.f32 %v339, 0.6931472
  %v341 = vmul.f32 %v317, %v326
  %v342 = vmul.f32 %v318, %v328
  %v343 = vmul.f32 %v319, %v330
  %v344 = vmul.f32 %v320, %v332
  %v345 = vmul.f32 %v321, %v334
  %v346 = vmul.f32 %v322, %v336
  %v347 = vmul.f32 %v323, %v338
  %v348 = vmul.f32 %v324, %v340
  %vm349 = vcmask 7168
  %350 = vst.msk [vmem:[%s3] sm:$0xff] %vm349, %v341
  %351 = vst.msk [vmem:[%s3 + $0x8] sm:$0xff] %vm349, %v342
  %352 = vst.msk [vmem:[%s3 + $0x10] sm:$0xff] %vm349, %v343
  %353 = vst.msk [vmem:[%s3 + $0x18] sm:$0xff] %vm349, %v344
  %354 = vst.msk [vmem:[%s3 + $0x20] sm:$0xff] %vm349, %v345
  %355 = vst.msk [vmem:[%s3 + $0x28] sm:$0xff] %vm349, %v346
  %356 = vst.msk [vmem:[%s3 + $0x30] sm:$0xff] %vm349, %v347
  %357 = vst.msk [vmem:[%s3 + $0x38] sm:$0xff] %vm349, %v348
  // Predicated region
  $region14: #{tpu_custom_call.1} parent=0 // pred_check
    _
  $region15: #{tpu_custom_call.1} parent=0 // pred_check_branch
    %359 = sbr.rel (0) target = $region17
  $region16: #{tpu_custom_call.1} parent=0 // pred_region
    _
  $region17: #{tpu_custom_call.1} parent=0 // pred_fallthru
    _
  // Predicated region
  $region18: #{tpu_custom_call.1} parent=0 // pred_check
    _
  $region19: #{tpu_custom_call.1} parent=0 // pred_check_branch
    %361 = sbr.rel (0) target = $region21
  $region20: #{tpu_custom_call.1} parent=0 // pred_region
    _
  $region21: #{tpu_custom_call.1} parent=0 // pred_fallthru
    _

</llo_original>
